<compile_context>
chip_gen: v6e
topology: v6e:2x2x1
jax: 0.10.0
libtpu: 0.0.40
codegen_flags: <defaults>
</compile_context>

<pallas_src>
import jax
import jax.numpy as jnp
from jax.experimental import pallas as pl
from jax.experimental.pallas import tpu as pltpu


def actor_kernel(x_ref, w0_ref, b0_ref, w1_ref, b1_ref, w2_ref, b2_ref, mu_ref):
    # Static sizes recovered from the refs.
    H1 = w1_ref.shape[0]              # hidden_1
    NH1 = w0_ref.shape[1]             # num_points * hidden_1
    N = NH1 // H1                     # num_points

    # fc0 as a single lane-dense MXU matmul against the block-diagonal weight:
    # (TB, N*D) @ (N*D, N*H1) -> (TB, N*H1), column n*H1 + h == point n, feature h.
    z0 = jnp.dot(x_ref[...], w0_ref[...], preferred_element_type=jnp.float32) + b0_ref[...]

    # Max-pool over the points axis: N-1 elementwise maxima over static H1-lane slices.
    pooled = z0[:, 0:H1]
    for n in range(1, N):
        pooled = jnp.maximum(pooled, z0[:, n * H1:(n + 1) * H1])
    # tanh AFTER the max (exact: tanh is monotone) -> TB*H1 transcendentals, not TB*N*H1.
    pooled = jnp.tanh(pooled)                                         # (TB, H1)

    # fc1 + tanh
    h1 = jnp.tanh(
        jnp.dot(pooled, w1_ref[...], preferred_element_type=jnp.float32) + b1_ref[...]
    )                                                                 # (TB, H2)

    # fc2 + softmax(dim=-1) over the K real columns; exact normalization (no approx recip).
    logits = jnp.dot(h1, w2_ref[...], preferred_element_type=jnp.float32) + b2_ref[...]
    m = jnp.max(logits, axis=-1, keepdims=True)
    e = jnp.exp(logits - m)
    mu_ref[...] = e / jnp.sum(e, axis=-1, keepdims=True)              # (TB, K)


def actor_forward(x, params, *, tb=2048):
    """x: (B, num_points, num_inputs); params from init_params. Returns (B, K) f32."""
    w0, b0, w1, b1, w2, b2 = params
    B, N, D = x.shape
    # PyTorch MaxPool1d(num_inputs) over the points axis only collapses all points
    # when num_points == num_inputs (intended PointNet use).
    # TODO(synk): implement windowed pooling for num_points != num_inputs.
    assert N == D, "Actor assumes num_points == num_inputs (MaxPool1d(num_inputs))."

    H1 = w0.shape[1]
    K = w2.shape[1]

    # Lane-dense restructuring (trace-time, tiny):
    #   x -> (B, N*D); fc0 weight -> block-diagonal (N*D, N*H1); bias tiled to (1, N*H1).
    x_flat = x.reshape(B, N * D)
    w0_bd = jnp.kron(jnp.eye(N, dtype=w0.dtype), w0)   # (N*D, N*H1), blocks of w0
    b0_t = jnp.tile(b0, (1, N))                        # (1, N*H1)

    # Batch tile: large (default 2048) to amortize ~0.35us/grid-step overhead, but keep
    # at least 2 grid blocks when possible so both v7x TensorCores get work.
    TB = max(8, min(tb, ((B + 15) // 16) * 8))         # ~B/2, sublane-aligned, capped
    Bp = ((B + TB - 1) // TB) * TB
    xp = jnp.pad(x_flat, ((0, Bp - B), (0, 0))) if Bp != B else x_flat

    grid_spec = pl.GridSpec(
        grid=(Bp // TB,),
        in_specs=[
            pl.BlockSpec((TB, N * D), lambda i: (i, 0)),   # x: streamed per batch tile
            pl.BlockSpec(w0_bd.shape, lambda i: (0, 0)),   # weights stay VMEM-resident
            pl.BlockSpec(b0_t.shape, lambda i: (0, 0)),
            pl.BlockSpec(w1.shape, lambda i: (0, 0)),
            pl.BlockSpec(b1.shape, lambda i: (0, 0)),
            pl.BlockSpec(w2.shape, lambda i: (0, 0)),
            pl.BlockSpec(b2.shape, lambda i: (0, 0)),
        ],
        # Narrow (TB, K) output: minimal HBM writeback (16 B/row at K=4) instead of a
        # 128-lane padded slab; block last dim == full array dim so it is legal.
        out_specs=pl.BlockSpec((TB, K), lambda i: (i, 0)),
    )

    mu = pl.pallas_call(
        actor_kernel,
        out_shape=jax.ShapeDtypeStruct((Bp, K), jnp.float32),
        grid_spec=grid_spec,
        compiler_params=pltpu.CompilerParams(
            dimension_semantics=("parallel",),       # shard batch tiles across TCs (v7x)
            vmem_limit_bytes=32 * 1024 * 1024,       # raise v5e's 16 MiB default scope
        ),
    )(xp, w0_bd, b0_t, w1, b1, w2, b2)

    return mu[:B] if Bp != B else mu


def init_params(key, num_inputs, hidden_1, hidden_2, num_outputs):
    """Deterministic PyTorch-style Linear init (uniform +-1/sqrt(fan_in))."""
    ks = jax.random.split(key, 6)

    def linear(kw, kb, fan_in, fan_out):
        bound = 1.0 / float(fan_in) ** 0.5
        w = jax.random.uniform(kw, (fan_in, fan_out), jnp.float32, -bound, bound)
        b = jax.random.uniform(kb, (1, fan_out), jnp.float32, -bound, bound)
        return w, b

    w0, b0 = linear(ks[0], ks[1], num_inputs, hidden_1)
    w1, b1 = linear(ks[2], ks[3], hidden_1, hidden_2)
    w2, b2 = linear(ks[4], ks[5], hidden_2, num_outputs)
    w2 = w2 * 0.1  # self.fc2.weight.data.mul_(0.1)
    b2 = b2 * 0.0  # self.fc2.bias.data.mul_(0.0)
    return w0, b0, w1, b1, w2, b2


def actor_reference(x, params):
    """Pure-JAX reference for correctness check."""
    w0, b0, w1, b1, w2, b2 = params
    h0 = jnp.tanh(x @ w0 + b0)             # (B, N, H1)
    pooled = jnp.max(h0, axis=1)           # maxpool over points
    h1 = jnp.tanh(pooled @ w1 + b1)
    logits = h1 @ w2 + b2
    return jax.nn.softmax(logits, axis=-1)


if __name__ == "__main__":
    B = 16              # small, but > one tile so the pipelined / parallel path is exercised
    num_inputs = 8      # feature dim == num_points (MaxPool1d(num_inputs) collapses points)
    num_points = 8
    hidden_1 = 32
    hidden_2 = 32
    num_outputs = 4

    key = jax.random.PRNGKey(0)
    kx, kp = jax.random.split(key)
    x = jax.random.normal(kx, (B, num_points, num_inputs), dtype=jnp.float32)
    params = init_params(kp, num_inputs, hidden_1, hidden_2, num_outputs)

    mu = actor_forward(x, params)          # TB=8 here -> grid=(2,)
    mu = jax.block_until_ready(mu)

    ref = actor_reference(x, params)
    assert mu.shape == (B, num_outputs)
    # Tolerance 1e-3: TPU f32 matmuls use bf16 MXU passes by default and Mosaic/XLA may
    # decompose them slightly differently; the kernel itself has no approximations.
    assert jnp.allclose(mu, ref, atol=1e-3, rtol=1e-3), "mismatch vs JAX reference"
    # exact softmax normalization -> rows sum to 1 up to f32 rounding
    assert jnp.allclose(jnp.sum(mu, axis=-1), 1.0, atol=1e-5)

    print("KERNEL_OK")
</pallas_src>

<mosaic_0001>
module attributes {stable_mosaic.version = 11 : i64} {
  func.func @actor_kernel(%arg0: i32, %arg1: memref<8x64xf32, #tpu.memory_space<vmem>>, %arg2: memref<64x256xf32, #tpu.memory_space<vmem>>, %arg3: memref<1x256xf32, #tpu.memory_space<vmem>>, %arg4: memref<32x32xf32, #tpu.memory_space<vmem>>, %arg5: memref<1x32xf32, #tpu.memory_space<vmem>>, %arg6: memref<32x4xf32, #tpu.memory_space<vmem>>, %arg7: memref<1x4xf32, #tpu.memory_space<vmem>>, %arg8: memref<8x4xf32, #tpu.memory_space<vmem>>) attributes {dimension_semantics = [#tpu.dimension_semantics<parallel>], iteration_bounds = array<i64: 2>, scalar_prefetch = 0 : i64, scratch_operands = 0 : i64, tpu.core_type = #tpu.core_type<tc>, window_params = [{transform_indices = @transform_0, window_bounds = array<i64: 8, 64>}, {pipeline_mode = #tpu.pipeline_mode<synchronous>, transform_indices = @transform_1, window_bounds = array<i64: 64, 256>}, {pipeline_mode = #tpu.pipeline_mode<synchronous>, transform_indices = @transform_2, window_bounds = array<i64: 1, 256>}, {pipeline_mode = #tpu.pipeline_mode<synchronous>, transform_indices = @transform_3, window_bounds = array<i64: 32, 32>}, {pipeline_mode = #tpu.pipeline_mode<synchronous>, transform_indices = @transform_4, window_bounds = array<i64: 1, 32>}, {pipeline_mode = #tpu.pipeline_mode<synchronous>, transform_indices = @transform_5, window_bounds = array<i64: 32, 4>}, {pipeline_mode = #tpu.pipeline_mode<synchronous>, transform_indices = @transform_6, window_bounds = array<i64: 1, 4>}, {transform_indices = @transform_7, window_bounds = array<i64: 8, 4>}]} {
    %c0 = arith.constant 0 : index
    %c0_0 = arith.constant 0 : index
    %0 = vector.load %arg1[%c0, %c0_0] : memref<8x64xf32, #tpu.memory_space<vmem>>, vector<8x64xf32>
    %c0_1 = arith.constant 0 : index
    %c0_2 = arith.constant 0 : index
    %1 = vector.load %arg2[%c0_1, %c0_2] : memref<64x256xf32, #tpu.memory_space<vmem>>, vector<64x256xf32>
    %cst = arith.constant dense<0.000000e+00> : vector<8x256xf32>
    %2 = tpu.matmul %0, %1, %cst {dimension_numbers = #tpu.dot_dimension_numbers<[1], [0], [0], [1], [0, 0, 1, 1], [], []>} : vector<8x64xf32>, vector<64x256xf32>, vector<8x256xf32> -> vector<8x256xf32>
    %c0_3 = arith.constant 0 : index
    %c0_4 = arith.constant 0 : index
    %3 = vector.load %arg3[%c0_3, %c0_4] : memref<1x256xf32, #tpu.memory_space<vmem>>, vector<1x256xf32>
    %4 = vector.broadcast %3 : vector<1x256xf32> to vector<8x256xf32>
    %5 = arith.addf %2, %4 : vector<8x256xf32>
    %6 = vector.extract_strided_slice %5 {offsets = [0, 0], sizes = [8, 32], strides = [1, 1]} : vector<8x256xf32> to vector<8x32xf32>
    %7 = vector.extract_strided_slice %5 {offsets = [0, 32], sizes = [8, 32], strides = [1, 1]} : vector<8x256xf32> to vector<8x32xf32>
    %8 = arith.maximumf %6, %7 : vector<8x32xf32>
    %9 = vector.extract_strided_slice %5 {offsets = [0, 64], sizes = [8, 32], strides = [1, 1]} : vector<8x256xf32> to vector<8x32xf32>
    %10 = arith.maximumf %8, %9 : vector<8x32xf32>
    %11 = vector.extract_strided_slice %5 {offsets = [0, 96], sizes = [8, 32], strides = [1, 1]} : vector<8x256xf32> to vector<8x32xf32>
    %12 = arith.maximumf %10, %11 : vector<8x32xf32>
    %13 = vector.extract_strided_slice %5 {offsets = [0, 128], sizes = [8, 32], strides = [1, 1]} : vector<8x256xf32> to vector<8x32xf32>
    %14 = arith.maximumf %12, %13 : vector<8x32xf32>
    %15 = vector.extract_strided_slice %5 {offsets = [0, 160], sizes = [8, 32], strides = [1, 1]} : vector<8x256xf32> to vector<8x32xf32>
    %16 = arith.maximumf %14, %15 : vector<8x32xf32>
    %17 = vector.extract_strided_slice %5 {offsets = [0, 192], sizes = [8, 32], strides = [1, 1]} : vector<8x256xf32> to vector<8x32xf32>
    %18 = arith.maximumf %16, %17 : vector<8x32xf32>
    %19 = vector.extract_strided_slice %5 {offsets = [0, 224], sizes = [8, 32], strides = [1, 1]} : vector<8x256xf32> to vector<8x32xf32>
    %20 = arith.maximumf %18, %19 : vector<8x32xf32>
    %21 = math.tanh %20 : vector<8x32xf32>
    %c0_5 = arith.constant 0 : index
    %c0_6 = arith.constant 0 : index
    %22 = vector.load %arg4[%c0_5, %c0_6] : memref<32x32xf32, #tpu.memory_space<vmem>>, vector<32x32xf32>
    %cst_7 = arith.constant dense<0.000000e+00> : vector<8x32xf32>
    %23 = tpu.matmul %21, %22, %cst_7 {dimension_numbers = #tpu.dot_dimension_numbers<[1], [0], [0], [1], [0, 0, 1, 1], [], []>} : vector<8x32xf32>, vector<32x32xf32>, vector<8x32xf32> -> vector<8x32xf32>
    %c0_8 = arith.constant 0 : index
    %c0_9 = arith.constant 0 : index
    %24 = vector.load %arg5[%c0_8, %c0_9] : memref<1x32xf32, #tpu.memory_space<vmem>>, vector<1x32xf32>
    %25 = vector.broadcast %24 : vector<1x32xf32> to vector<8x32xf32>
    %26 = arith.addf %23, %25 : vector<8x32xf32>
    %27 = math.tanh %26 : vector<8x32xf32>
    %c0_10 = arith.constant 0 : index
    %c0_11 = arith.constant 0 : index
    %28 = vector.load %arg6[%c0_10, %c0_11] : memref<32x4xf32, #tpu.memory_space<vmem>>, vector<32x4xf32>
    %cst_12 = arith.constant dense<0.000000e+00> : vector<8x4xf32>
    %29 = tpu.matmul %27, %28, %cst_12 {dimension_numbers = #tpu.dot_dimension_numbers<[1], [0], [0], [1], [0, 0, 1, 1], [], []>} : vector<8x32xf32>, vector<32x4xf32>, vector<8x4xf32> -> vector<8x4xf32>
    %c0_13 = arith.constant 0 : index
    %c0_14 = arith.constant 0 : index
    %30 = vector.load %arg7[%c0_13, %c0_14] : memref<1x4xf32, #tpu.memory_space<vmem>>, vector<1x4xf32>
    %31 = vector.broadcast %30 : vector<1x4xf32> to vector<8x4xf32>
    %32 = arith.addf %29, %31 : vector<8x4xf32>
    %cst_15 = arith.constant dense<0xFF800000> : vector<8xf32>
    %33 = vector.multi_reduction <maximumf>, %32, %cst_15 [1] : vector<8x4xf32> to vector<8xf32>
    %34 = vector.shape_cast %33 : vector<8xf32> to vector<8x1xf32>
    %35 = vector.broadcast %34 : vector<8x1xf32> to vector<8x4xf32>
    %36 = arith.subf %32, %35 : vector<8x4xf32>
    %37 = math.exp %36 : vector<8x4xf32>
    %cst_16 = arith.constant dense<0.000000e+00> : vector<8xf32>
    %38 = vector.multi_reduction <add>, %37, %cst_16 [1] : vector<8x4xf32> to vector<8xf32>
    %39 = vector.shape_cast %38 : vector<8xf32> to vector<8x1xf32>
    %40 = vector.broadcast %39 : vector<8x1xf32> to vector<8x4xf32>
    %41 = arith.divf %37, %40 : vector<8x4xf32>
    %c0_17 = arith.constant 0 : index
    %c0_18 = arith.constant 0 : index
    %42 = vector.load %arg8[%c0_17, %c0_18] : memref<8x4xf32, #tpu.memory_space<vmem>>, vector<8x4xf32>
    tpu.vector_store %arg8[%c0_17, %c0_18], %41 {strides = array<i32>} : memref<8x4xf32, #tpu.memory_space<vmem>>, vector<8x4xf32>,
    return
  }
  func.func @transform_0(%arg0: i32) -> (i32, i32) {
    %c0_i32 = arith.constant 0 : i32
    %c0_i32_0 = arith.constant 0 : i32
    return %arg0, %c0_i32 : i32, i32
  }
  func.func @transform_1(%arg0: i32) -> (i32, i32) {
    %c0_i32 = arith.constant 0 : i32
    %c0_i32_0 = arith.constant 0 : i32
    %c0_i32_1 = arith.constant 0 : i32
    return %c0_i32, %c0_i32_0 : i32, i32
  }
  func.func @transform_2(%arg0: i32) -> (i32, i32) {
    %c0_i32 = arith.constant 0 : i32
    %c0_i32_0 = arith.constant 0 : i32
    %c0_i32_1 = arith.constant 0 : i32
    return %c0_i32, %c0_i32_0 : i32, i32
  }
  func.func @transform_3(%arg0: i32) -> (i32, i32) {
    %c0_i32 = arith.constant 0 : i32
    %c0_i32_0 = arith.constant 0 : i32
    %c0_i32_1 = arith.constant 0 : i32
    return %c0_i32, %c0_i32_0 : i32, i32
  }
  func.func @transform_4(%arg0: i32) -> (i32, i32) {
    %c0_i32 = arith.constant 0 : i32
    %c0_i32_0 = arith.constant 0 : i32
    %c0_i32_1 = arith.constant 0 : i32
    return %c0_i32, %c0_i32_0 : i32, i32
  }
  func.func @transform_5(%arg0: i32) -> (i32, i32) {
    %c0_i32 = arith.constant 0 : i32
    %c0_i32_0 = arith.constant 0 : i32
    %c0_i32_1 = arith.constant 0 : i32
    return %c0_i32, %c0_i32_0 : i32, i32
  }
  func.func @transform_6(%arg0: i32) -> (i32, i32) {
    %c0_i32 = arith.constant 0 : i32
    %c0_i32_0 = arith.constant 0 : i32
    %c0_i32_1 = arith.constant 0 : i32
    return %c0_i32, %c0_i32_0 : i32, i32
  }
  func.func @transform_7(%arg0: i32) -> (i32, i32) {
    %c0_i32 = arith.constant 0 : i32
    %c0_i32_0 = arith.constant 0 : i32
    return %arg0, %c0_i32 : i32, i32
  }
}

</mosaic_0001>

<llo_original>
// kernel: tpu_custom_call.1
$region0: #{tpu_custom_call.1}
  #allocation0 [shape = 'u32[]', space=smem, size = 0x4, offset = 0x4, fixed_abs, tag = 'smem constant byte address 0x4 - core index']
  #allocation1 [shape = 'u32[144,128]{1,0:T(1,128)}', space=vmem, size = 0x12000, scoped, tag = 'internal scratch']
  %s0 = inlined_call_operand.hbm [shape: f32[16,64], index: 0, kind: input, shape index: {}]
  %s1 = inlined_call_operand.hbm [shape: f32[64,256], index: 1, kind: input, shape index: {}]
  %s2 = inlined_call_operand.vmem [shape: f32[1,256], index: 2, kind: input, shape index: {}]
  %s3 = inlined_call_operand.vmem [shape: f32[32,32], index: 3, kind: input, shape index: {}]
  %s4 = inlined_call_operand.vmem [shape: f32[1,32], index: 4, kind: input, shape index: {}]
  %s5 = inlined_call_operand.vmem [shape: f32[32,4], index: 5, kind: input, shape index: {}]
  %s6 = inlined_call_operand.vmem [shape: f32[1,4], index: 6, kind: input, shape index: {}]
  %s7 = inlined_call_operand.vmem [shape: f32[16,4], index: 7, kind: output, shape index: {}]
  %s8 = sld [smem:[#allocation0]]
  $region69: #{tpu_custom_call.1} parent=0
    _
  %s10 = ssub.s32 1, %s8
  %s11 = scalar_select 0, %s10, %s8
  $region1: #{tpu_custom_call.1} parent=0
    #allocation2 [shape = 'u8[8192]{0}', space=vmem, size = 0x2000, scoped, tag = 'input window, operand 0']
    #allocation3 [shape = 's32[2]{0}', space=sflag, size = 0x8, scoped, tag = 'scoped memory for tpu_custom_call.1']
    #allocation4 [shape = 'u8[65536]{0}', space=vmem, size = 0x10000, scoped, tag = 'input window, operand 1, single buffered']
    #allocation5 [shape = 's32[1]{0}', space=sflag, size = 0x4, scoped, tag = 'scoped memory for tpu_custom_call.1']
    %12 = vsyncpa [#allocation3], 0
    %s13 = scalar_lea.sflag [#allocation3], 1
    %14 = vsyncpa %s13, 0
    %15 = vsyncpa [#allocation5], 0
    loop: start=0, step=1, limit=4
    $region2: #{tpu_custom_call.1} parent=1 // loop_pre_header
      _
    $region3: #{tpu_custom_call.1} parent=1 // loop_header
      %s17 = sphi 0, %s21
      %p18 = scmp.ge.s32.totalorder %s17, 4
      %s27 = sphi 0, %s29
      %s30 = sphi 0, %s27
      %s31 = sphi 0, %s30
      %s47 = sphi 0, %s31
      %s51 = sphi 0, %s51
      %s53 = sphi 0, %s51
      %s54 = sphi 0, %s53
      %s68 = sphi 0, %s54
      %s72 = sphi 0, %s72
      %s74 = sphi 0, %s72
      %s75 = sphi 0, %s74
      %s89 = sphi 0, %s75
      %s93 = sphi 0, %s93
      %s95 = sphi 0, %s93
      %s96 = sphi 0, %s95
      %s110 = sphi 0, %s96
      %s114 = sphi 0, %s114
      %s116 = sphi 0, %s114
      %s117 = sphi 0, %s116
      %s131 = sphi 0, %s117
      %s135 = sphi 0, %s135
      %s137 = sphi 0, %s135
      %s138 = sphi 0, %s137
      %s152 = sphi 0, %s138
      %s156 = sphi 0, %s156
      %s158 = sphi 0, %s156
      %s159 = sphi 0, %s158
      %s173 = sphi 0, %s159
      %s179 = sphi 0, %s181
      %s182 = sphi 0, %s179
      %s183 = sphi 0, %s182
      %s199 = sphi 0, %s183
    $region4: #{tpu_custom_call.1} parent=1 // loop_header_branch
      %20 = sbr.rel (%p18) target = $region8
    $region5: #{tpu_custom_call.1} parent=1 // loop_body
      %s22 = ssub.s32 %s17, 1
      %s23 = ssub.s32 %s17, 2
      %s24 = sadd.s32 %s17, 1
      %s25 = ssub.s32 %s17, %s24
      %p26 = scmp.eq.s32.totalorder %s25, 0
      %s28 = sadd.s32 %s27, 1
      %s29 = scalar_select %p26, %s27, %s28
      %p32 = pneg %p26
      %p33 = scmp.eq.s32.totalorder %s17, 1
      %p34 = por %p32, %p33
      %p35 = scmp.ne.s32.totalorder %s27, %s30
      %p36 = scmp.eq.s32.totalorder %s17, 0
      %p37 = por %p35, %p36
      %p38 = scmp.ne.s32.totalorder %s27, %s30
      %p39 = scmp.eq.s32.totalorder %s22, 1
      %p40 = por %p38, %p39
      %p41 = scmp.ne.s32.totalorder %s30, %s31
      %p42 = scmp.eq.s32.totalorder %s22, 0
      %p43 = por %p41, %p42
      %p44 = scmp.ne.s32.totalorder %s30, %s31
      %p45 = scmp.eq.s32.totalorder %s23, 1
      %p46 = por %p44, %p45
      %p48 = scmp.ne.s32.totalorder %s31, %s47
      %p49 = scmp.eq.s32.totalorder %s23, 0
      %p50 = por %p48, %p49
      %s52 = sadd.s32 %s51, 1
      %p55 = scmp.eq.s32.totalorder %s17, 1
      %p56 = scmp.ne.s32.totalorder %s51, %s53
      %p57 = scmp.eq.s32.totalorder %s17, 0
      %p58 = por %p56, %p57
      %p59 = scmp.ne.s32.totalorder %s51, %s53
      %p60 = scmp.eq.s32.totalorder %s22, 1
      %p61 = por %p59, %p60
      %p62 = scmp.ne.s32.totalorder %s53, %s54
      %p63 = scmp.eq.s32.totalorder %s22, 0
      %p64 = por %p62, %p63
      %p65 = scmp.ne.s32.totalorder %s53, %s54
      %p66 = scmp.eq.s32.totalorder %s23, 1
      %p67 = por %p65, %p66
      %p69 = scmp.ne.s32.totalorder %s54, %s68
      %p70 = scmp.eq.s32.totalorder %s23, 0
      %p71 = por %p69, %p70
      %s73 = sadd.s32 %s72, 1
      %p76 = scmp.eq.s32.totalorder %s17, 1
      %p77 = scmp.ne.s32.totalorder %s72, %s74
      %p78 = scmp.eq.s32.totalorder %s17, 0
      %p79 = por %p77, %p78
      %p80 = scmp.ne.s32.totalorder %s72, %s74
      %p81 = scmp.eq.s32.totalorder %s22, 1
      %p82 = por %p80, %p81
      %p83 = scmp.ne.s32.totalorder %s74, %s75
      %p84 = scmp.eq.s32.totalorder %s22, 0
      %p85 = por %p83, %p84
      %p86 = scmp.ne.s32.totalorder %s74, %s75
      %p87 = scmp.eq.s32.totalorder %s23, 1
      %p88 = por %p86, %p87
      %p90 = scmp.ne.s32.totalorder %s75, %s89
      %p91 = scmp.eq.s32.totalorder %s23, 0
      %p92 = por %p90, %p91
      %s94 = sadd.s32 %s93, 1
      %p97 = scmp.eq.s32.totalorder %s17, 1
      %p98 = scmp.ne.s32.totalorder %s93, %s95
      %p99 = scmp.eq.s32.totalorder %s17, 0
      %p100 = por %p98, %p99
      %p101 = scmp.ne.s32.totalorder %s93, %s95
      %p102 = scmp.eq.s32.totalorder %s22, 1
      %p103 = por %p101, %p102
      %p104 = scmp.ne.s32.totalorder %s95, %s96
      %p105 = scmp.eq.s32.totalorder %s22, 0
      %p106 = por %p104, %p105
      %p107 = scmp.ne.s32.totalorder %s95, %s96
      %p108 = scmp.eq.s32.totalorder %s23, 1
      %p109 = por %p107, %p108
      %p111 = scmp.ne.s32.totalorder %s96, %s110
      %p112 = scmp.eq.s32.totalorder %s23, 0
      %p113 = por %p111, %p112
      %s115 = sadd.s32 %s114, 1
      %p118 = scmp.eq.s32.totalorder %s17, 1
      %p119 = scmp.ne.s32.totalorder %s114, %s116
      %p120 = scmp.eq.s32.totalorder %s17, 0
      %p121 = por %p119, %p120
      %p122 = scmp.ne.s32.totalorder %s114, %s116
      %p123 = scmp.eq.s32.totalorder %s22, 1
      %p124 = por %p122, %p123
      %p125 = scmp.ne.s32.totalorder %s116, %s117
      %p126 = scmp.eq.s32.totalorder %s22, 0
      %p127 = por %p125, %p126
      %p128 = scmp.ne.s32.totalorder %s116, %s117
      %p129 = scmp.eq.s32.totalorder %s23, 1
      %p130 = por %p128, %p129
      %p132 = scmp.ne.s32.totalorder %s117, %s131
      %p133 = scmp.eq.s32.totalorder %s23, 0
      %p134 = por %p132, %p133
      %s136 = sadd.s32 %s135, 1
      %p139 = scmp.eq.s32.totalorder %s17, 1
      %p140 = scmp.ne.s32.totalorder %s135, %s137
      %p141 = scmp.eq.s32.totalorder %s17, 0
      %p142 = por %p140, %p141
      %p143 = scmp.ne.s32.totalorder %s135, %s137
      %p144 = scmp.eq.s32.totalorder %s22, 1
      %p145 = por %p143, %p144
      %p146 = scmp.ne.s32.totalorder %s137, %s138
      %p147 = scmp.eq.s32.totalorder %s22, 0
      %p148 = por %p146, %p147
      %p149 = scmp.ne.s32.totalorder %s137, %s138
      %p150 = scmp.eq.s32.totalorder %s23, 1
      %p151 = por %p149, %p150
      %p153 = scmp.ne.s32.totalorder %s138, %s152
      %p154 = scmp.eq.s32.totalorder %s23, 0
      %p155 = por %p153, %p154
      %s157 = sadd.s32 %s156, 1
      %p160 = scmp.eq.s32.totalorder %s17, 1
      %p161 = scmp.ne.s32.totalorder %s156, %s158
      %p162 = scmp.eq.s32.totalorder %s17, 0
      %p163 = por %p161, %p162
      %p164 = scmp.ne.s32.totalorder %s156, %s158
      %p165 = scmp.eq.s32.totalorder %s22, 1
      %p166 = por %p164, %p165
      %p167 = scmp.ne.s32.totalorder %s158, %s159
      %p168 = scmp.eq.s32.totalorder %s22, 0
      %p169 = por %p167, %p168
      %p170 = scmp.ne.s32.totalorder %s158, %s159
      %p171 = scmp.eq.s32.totalorder %s23, 1
      %p172 = por %p170, %p171
      %p174 = scmp.ne.s32.totalorder %s159, %s173
      %p175 = scmp.eq.s32.totalorder %s23, 0
      %p176 = por %p174, %p175
      %s177 = ssub.s32 %s17, %s24
      %p178 = scmp.eq.s32.totalorder %s177, 0
      %s180 = sadd.s32 %s179, 1
      %s181 = scalar_select %p178, %s179, %s180
      %p184 = pneg %p178
      %p185 = scmp.eq.s32.totalorder %s17, 1
      %p186 = por %p184, %p185
      %p187 = scmp.ne.s32.totalorder %s179, %s182
      %p188 = scmp.eq.s32.totalorder %s17, 0
      %p189 = por %p187, %p188
      %p190 = scmp.ne.s32.totalorder %s179, %s182
      %p191 = scmp.eq.s32.totalorder %s22, 1
      %p192 = por %p190, %p191
      %p193 = scmp.ne.s32.totalorder %s182, %s183
      %p194 = scmp.eq.s32.totalorder %s22, 0
      %p195 = por %p193, %p194
      %p196 = scmp.ne.s32.totalorder %s182, %s183
      %p197 = scmp.eq.s32.totalorder %s23, 1
      %p198 = por %p196, %p197
      %p200 = scmp.ne.s32.totalorder %s183, %s199
      %p201 = scmp.eq.s32.totalorder %s23, 0
      %p202 = por %p200, %p201
      %p203 = scmp.le.s32.totalorder 1, %s17
      %p204 = scmp.lt.s32.totalorder %s17, 3
      %p205 = pnand %p203, %p204
      %p206 = pneg %p205
      // Predicated region
      $region9: #{tpu_custom_call.1} parent=5 // pred_check
        _
      $region10: #{tpu_custom_call.1} parent=5 // pred_check_branch
        %208 = sbr.rel (%p205) target = $region12
      $region11: #{tpu_custom_call.1} parent=5 // pred_region
        %s209 = ssub.s32 %s17, 1
        // Predicated region
        $region13: #{tpu_custom_call.1} parent=11 // pred_check
          %p210 = pneg %p64
        $region14: #{tpu_custom_call.1} parent=11 // pred_check_branch
          %212 = sbr.rel (%p210) target = $region16
        $region15: #{tpu_custom_call.1} parent=11 // pred_region
          %s214 = ssub.s32 2048, 2048
          %215 = vsyncadd [#allocation5], %s214
          %s216 = sshll.u32 [#allocation4], 4
          %s217 = int_to_ptr.vmem [resolvable:$true] %s216
          %222 = dma.hbm_to_vmem [thread:$0]  %s1, 2048, %s217, [#allocation5], 256, 256, 16
        $region16: #{tpu_custom_call.1} parent=11 // pred_fallthru
          _
        // Predicated region
        $region17: #{tpu_custom_call.1} parent=11 // pred_check
          %p223 = pneg %p85
        $region18: #{tpu_custom_call.1} parent=11 // pred_check_branch
          %225 = sbr.rel (%p223) target = $region20
        $region19: #{tpu_custom_call.1} parent=11 // pred_region
          _
        $region20: #{tpu_custom_call.1} parent=11 // pred_fallthru
          _
        // Predicated region
        $region21: #{tpu_custom_call.1} parent=11 // pred_check
          %p226 = pneg %p106
        $region22: #{tpu_custom_call.1} parent=11 // pred_check_branch
          %228 = sbr.rel (%p226) target = $region24
        $region23: #{tpu_custom_call.1} parent=11 // pred_region
          _
        $region24: #{tpu_custom_call.1} parent=11 // pred_fallthru
          _
        // Predicated region
        $region25: #{tpu_custom_call.1} parent=11 // pred_check
          %p229 = pneg %p127
        $region26: #{tpu_custom_call.1} parent=11 // pred_check_branch
          %231 = sbr.rel (%p229) target = $region28
        $region27: #{tpu_custom_call.1} parent=11 // pred_region
          _
        $region28: #{tpu_custom_call.1} parent=11 // pred_fallthru
          _
        // Predicated region
        $region29: #{tpu_custom_call.1} parent=11 // pred_check
          %p232 = pneg %p148
        $region30: #{tpu_custom_call.1} parent=11 // pred_check_branch
          %234 = sbr.rel (%p232) target = $region32
        $region31: #{tpu_custom_call.1} parent=11 // pred_region
          _
        $region32: #{tpu_custom_call.1} parent=11 // pred_fallthru
          _
        // Predicated region
        $region33: #{tpu_custom_call.1} parent=11 // pred_check
          %p235 = pneg %p169
        $region34: #{tpu_custom_call.1} parent=11 // pred_check_branch
          %237 = sbr.rel (%p235) target = $region36
        $region35: #{tpu_custom_call.1} parent=11 // pred_region
          _
        $region36: #{tpu_custom_call.1} parent=11 // pred_fallthru
          _
      $region12: #{tpu_custom_call.1} parent=5 // pred_fallthru
        _
      %p238 = scmp.lt.s32.totalorder %s17, 2
      // Predicated region
      $region37: #{tpu_custom_call.1} parent=5 // pred_check
        %p239 = pneg %p238
      $region38: #{tpu_custom_call.1} parent=5 // pred_check_branch
        %241 = sbr.rel (%p239) target = $region40
      $region39: #{tpu_custom_call.1} parent=5 // pred_region
        // Predicated region
        $region41: #{tpu_custom_call.1} parent=39 // pred_check
          %p242 = pneg %p37
        $region42: #{tpu_custom_call.1} parent=39 // pred_check_branch
          %244 = sbr.rel (%p242) target = $region44
        $region43: #{tpu_custom_call.1} parent=39 // pred_region
          %s245 = sand.u32 %s27, 1
          %s246 = scalar_lea.sflag [#allocation3], %s245
          %s247 = sand.u32 %s27, 1
          %s248 = smul.addr %s247, 8
          %s249 = scalar_lea.vmem [#allocation2], %s248
          %s251 = ssub.s32 128, 128
          %252 = vsyncadd %s246, %s251
          %s253 = smul.addr %s17, 128
          %s254 = scalar_lea.hbm %s0, %s253
          %s256 = sshll.u32 %s249, 4
          %s257 = int_to_ptr.vmem [resolvable:$true] %s256
          %259 = dma.hbm_to_vmem [thread:$0]  %s254, 128, %s257, %s246
        $region44: #{tpu_custom_call.1} parent=39 // pred_fallthru
          _
      $region40: #{tpu_custom_call.1} parent=5 // pred_fallthru
        _
      %p260 = scmp.le.s32.totalorder 1, %s17
      %p261 = scmp.lt.s32.totalorder %s17, 3
      %p262 = pnand %p260, %p261
      %p263 = pneg %p262
      // Predicated region
      $region45: #{tpu_custom_call.1} parent=5 // pred_check
        _
      $region46: #{tpu_custom_call.1} parent=5 // pred_check_branch
        %265 = sbr.rel (%p262) target = $region48
      $region47: #{tpu_custom_call.1} parent=5 // pred_region
        %s266 = ssub.s32 %s17, 1
        %s267 = sand.u32 %s30, 1
        %s268 = scalar_lea.sflag [#allocation3], %s267
        %s269 = sand.u32 %s30, 1
        %s270 = smul.addr %s269, 8
        %s271 = scalar_lea.vmem [#allocation2], %s270
        // Predicated region
        $region49: #{tpu_custom_call.1} parent=47 // pred_check
          %p272 = pneg %p43
        $region50: #{tpu_custom_call.1} parent=47 // pred_check_branch
          %274 = sbr.rel (%p272) target = $region52
        $region51: #{tpu_custom_call.1} parent=47 // pred_region
          %275 = dma.done %s268, 128
        $region52: #{tpu_custom_call.1} parent=47 // pred_fallthru
          _
        // Predicated region
        $region53: #{tpu_custom_call.1} parent=47 // pred_check
          %p276 = pneg %p64
        $region54: #{tpu_custom_call.1} parent=47 // pred_check_branch
          %278 = sbr.rel (%p276) target = $region56
        $region55: #{tpu_custom_call.1} parent=47 // pred_region
          %279 = dma.done [#allocation5], 2048
        $region56: #{tpu_custom_call.1} parent=47 // pred_fallthru
          _
        %s280 = sand.u32 %s30, 1
        %s281 = scalar_lea.sflag [#allocation3], %s280
        %s282 = sand.u32 %s30, 1
        %s283 = smul.addr %s282, 8
        %s284 = scalar_lea.vmem [#allocation2], %s283
        %p285 = pneg %p43
        %p286 = pneg %p40
        %p287 = pneg %p64
        %p288 = pneg %p61
        %p289 = pneg %p85
        %p290 = pneg %p82
        %p291 = pneg %p106
        %p292 = pneg %p103
        %p293 = pneg %p127
        %p294 = pneg %p124
        %p295 = pneg %p148
        %p296 = pneg %p145
        %p297 = pneg %p169
        %p298 = pneg %p166
        %p299 = pneg %p195
        %p300 = pneg %p192
        %p301 = scmp.lt.s32.totalorder %s22, 1
        %s302 = scalar_select %p301, %s22, 1
        %s303 = smul.addr %s302, 8
        %s304 = scalar_lea.vmem %s7, %s303
        %p305 = scmp.lt.s32.totalorder %s22, 1
        %s306 = scalar_select %p305, %s22, 1
        %s307 = smul.addr %s306, 8
        %s308 = scalar_lea.vmem %s7, %s307
        %v309 = vld [vmem:[%s271] sm:$0xff]
        %v310 = vld [vmem:[#allocation4] sm:$0xff]
        %v311 = vld [vmem:[#allocation4 + $0x8] sm:$0xff]
        %v312 = vld [vmem:[#allocation4 + $0x10] sm:$0xff]
        %v313 = vld [vmem:[#allocation4 + $0x18] sm:$0xff]
        %v314 = vld [vmem:[#allocation4 + $0x20] sm:$0xff]
        %v315 = vld [vmem:[#allocation4 + $0x28] sm:$0xff]
        %v316 = vld [vmem:[#allocation4 + $0x30] sm:$0xff]
        %v317 = vld [vmem:[#allocation4 + $0x38] sm:$0xff]
        %v318 = vld [vmem:[#allocation4 + $0x40] sm:$0xff]
        %v319 = vld [vmem:[#allocation4 + $0x48] sm:$0xff]
        %v320 = vld [vmem:[#allocation4 + $0x50] sm:$0xff]
        %v321 = vld [vmem:[#allocation4 + $0x58] sm:$0xff]
        %v322 = vld [vmem:[#allocation4 + $0x60] sm:$0xff]
        %v323 = vld [vmem:[#allocation4 + $0x68] sm:$0xff]
        %v324 = vld [vmem:[#allocation4 + $0x70] sm:$0xff]
        %v325 = vld [vmem:[#allocation4 + $0x78] sm:$0xff]
        %v326 = vld [vmem:[%s2] sm:$0x3]
        %v328 = vlaneseq
        %v329 = vshrl.u32 %v328, 7
        %v330 = vsub.s32 0, %v329
        %v331 = vrot.slane %v326, %v330
        %v332 = vlaneseq
        %v333 = vshrl.u32 %v332, 7
        %v334 = vsub.s32 1, %v333
        %v335 = vrot.slane %v326, %v334
        %vm338 = vcmask 523264
        %v340 = vsel %vm338, %v309, 0
        %342 = vmatprep.subr.mxu0 0.0
        %343 = vmatpush1.msra.mxu0 0.0
        %344 = vmatprep.subr.mxu0 0.0
        %345 = vmatpush1.msra.mxu0 0.0
        %346 = vmatprep.subr.mxu0 0.0
        %347 = vmatpush1.msra.mxu0 0.0
        %348 = vmatprep.subr.mxu0 0.0
        %349 = vmatpush1.msra.mxu0 0.0
        %350 = vmatprep.subr.mxu0 0.0
        %351 = vmatpush1.msra.mxu0 0.0
        %352 = vmatprep.subr.mxu0 0.0
        %353 = vmatpush1.msra.mxu0 0.0
        %354 = vmatprep.subr.mxu0 0.0
        %355 = vmatpush1.msra.mxu0 0.0
        %356 = vmatprep.subr.mxu0 0.0
        %357 = vmatpush1.msra.mxu0 0.0
        %358 = vmatprep.subr.mxu0 %v325
        %359 = vmatpush1.msra.mxu0 %v324
        %360 = vmatprep.subr.mxu0 %v323
        %361 = vmatpush1.msra.mxu0 %v322
        %362 = vmatprep.subr.mxu0 %v321
        %363 = vmatpush1.msra.mxu0 %v320
        %364 = vmatprep.subr.mxu0 %v319
        %365 = vmatpush1.msra.mxu0 %v318
        %366 = vmatprep.subr.mxu0 %v317
        %367 = vmatpush1.msra.mxu0 %v316
        %368 = vmatprep.subr.mxu0 %v315
        %369 = vmatpush1.msra.mxu0 %v314
        %370 = vmatprep.subr.mxu0 %v313
        %371 = vmatpush1.msra.mxu0 %v312
        %372 = vmatprep.subr.mxu0 %v311
        %373 = vmatpush1.msra.mxu0 %v310
        %374 = vmatprep.subr.mxu0 0.0
        %375 = vmatpush2.msra.mxu0 0.0
        %376 = vmatprep.subr.mxu0 0.0
        %377 = vmatpush2.msra.mxu0 0.0
        %378 = vmatprep.subr.mxu0 0.0
        %379 = vmatpush2.msra.mxu0 0.0
        %380 = vmatprep.subr.mxu0 0.0
        %381 = vmatpush2.msra.mxu0 0.0
        %382 = vmatprep.subr.mxu0 0.0
        %383 = vmatpush2.msra.mxu0 0.0
        %384 = vmatprep.subr.mxu0 0.0
        %385 = vmatpush2.msra.mxu0 0.0
        %386 = vmatprep.subr.mxu0 0.0
        %387 = vmatpush2.msra.mxu0 0.0
        %388 = vmatprep.subr.mxu0 0.0
        %389 = vmatpush2.msra.mxu0 0.0
        %390 = vmatprep.subr.mxu0 0.0
        %391 = vmatpush2.msra.mxu0 0.0
        %392 = vmatprep.subr.mxu0 0.0
        %393 = vmatpush2.msra.mxu0 0.0
        %394 = vmatprep.subr.mxu0 0.0
        %395 = vmatpush2.msra.mxu0 0.0
        %396 = vmatprep.subr.mxu0 0.0
        %397 = vmatpush2.msra.mxu0 0.0
        %398 = vmatprep.subr.mxu0 0.0
        %399 = vmatpush2.msra.mxu0 0.0
        %400 = vmatprep.subr.mxu0 0.0
        %401 = vmatpush2.msra.mxu0 0.0
        %402 = vmatprep.subr.mxu0 0.0
        %403 = vmatpush2.msra.mxu0 0.0
        %404 = vmatprep.subr.mxu0 0.0
        %405 = vmatpush2.msra.mxu0 0.0
        %406 = vmatprep.mubr.f32.mxu0 0.0
        %407 = vmatmul.mubr.f32.gmra.mxu0 %v340
        %v408 = vpop.f32.mrf.mxu0
        %v409 = vadd.f32 %v331, %v408
        %v410 = vpop.f32.mrf.mxu0
        %v411 = vadd.f32 %v335, %v410
        %412 = vdwg.mxu0
        %414 = vrot.lane.b32.xlu0 %v409, 96
        %v415 = vpop.permute.xlu0 %414
        %v417 = vmax.f32 %v409, %v415
        %418 = vrot.lane.b32.xlu0 %v409, 64
        %v419 = vpop.permute.xlu0 %418
        %v421 = vmax.f32 %v417, %v419
        %422 = vrot.lane.b32.xlu0 %v409, 32
        %v423 = vpop.permute.xlu0 %422
        %v425 = vmax.f32 %v421, %v423
        %v426 = vmax.f32 %v425, %v411
        %428 = vrot.lane.b32.xlu0 %v411, 96
        %v429 = vpop.permute.xlu0 %428
        %v431 = vmax.f32 %v426, %v429
        %432 = vrot.lane.b32.xlu0 %v411, 64
        %v433 = vpop.permute.xlu0 %432
        %v435 = vmax.f32 %v431, %v433
        %436 = vrot.lane.b32.xlu0 %v411, 32
        %v437 = vpop.permute.xlu0 %436
        %v439 = vmax.f32 %v435, %v437
        %v440 = vtanh.pop %v439
        %v441 = vld [vmem:[%s3] sm:$0xff]
        %v442 = vld [vmem:[%s3 + $0x8] sm:$0xff]
        %v443 = vld [vmem:[%s3 + $0x10] sm:$0xff]
        %v444 = vld [vmem:[%s3 + $0x18] sm:$0xff]
        %v445 = vld [vmem:[%s4] sm:$0x1]
        %v447 = vlaneseq
        %v448 = vshrl.u32 %v447, 7
        %v449 = vsub.s32 0, %v448
        %v450 = vrot.slane %v445, %v449
        %vm452 = vcmask 261120
        %v454 = vsel %vm452, %v440, 0
        %456 = vmatprep.subr.mxu0 0.0
        %457 = vmatpush1.msra.mxu0 0.0
        %458 = vmatprep.subr.mxu0 0.0
        %459 = vmatpush1.msra.mxu0 0.0
        %460 = vmatprep.subr.mxu0 0.0
        %461 = vmatpush1.msra.mxu0 0.0
        %462 = vmatprep.subr.mxu0 0.0
        %463 = vmatpush1.msra.mxu0 0.0
        %464 = vmatprep.subr.mxu0 0.0
        %465 = vmatpush1.msra.mxu0 0.0
        %466 = vmatprep.subr.mxu0 0.0
        %467 = vmatpush1.msra.mxu0 0.0
        %468 = vmatprep.subr.mxu0 0.0
        %469 = vmatpush1.msra.mxu0 0.0
        %470 = vmatprep.subr.mxu0 0.0
        %471 = vmatpush1.msra.mxu0 0.0
        %472 = vmatprep.subr.mxu0 0.0
        %473 = vmatpush1.msra.mxu0 0.0
        %474 = vmatprep.subr.mxu0 0.0
        %475 = vmatpush1.msra.mxu0 0.0
        %476 = vmatprep.subr.mxu0 0.0
        %477 = vmatpush1.msra.mxu0 0.0
        %478 = vmatprep.subr.mxu0 0.0
        %479 = vmatpush1.msra.mxu0 0.0
        %480 = vmatprep.subr.mxu0 0.0
        %481 = vmatpush1.msra.mxu0 %v444
        %482 = vmatprep.subr.mxu0 0.0
        %483 = vmatpush1.msra.mxu0 %v443
        %484 = vmatprep.subr.mxu0 0.0
        %485 = vmatpush1.msra.mxu0 %v442
        %486 = vmatprep.subr.mxu0 0.0
        %487 = vmatpush1.msra.mxu0 %v441
        %488 = vmatprep.subr.mxu0 0.0
        %489 = vmatpush2.msra.mxu0 0.0
        %490 = vmatprep.subr.mxu0 0.0
        %491 = vmatpush2.msra.mxu0 0.0
        %492 = vmatprep.subr.mxu0 0.0
        %493 = vmatpush2.msra.mxu0 0.0
        %494 = vmatprep.subr.mxu0 0.0
        %495 = vmatpush2.msra.mxu0 0.0
        %496 = vmatprep.subr.mxu0 0.0
        %497 = vmatpush2.msra.mxu0 0.0
        %498 = vmatprep.subr.mxu0 0.0
        %499 = vmatpush2.msra.mxu0 0.0
        %500 = vmatprep.subr.mxu0 0.0
        %501 = vmatpush2.msra.mxu0 0.0
        %502 = vmatprep.subr.mxu0 0.0
        %503 = vmatpush2.msra.mxu0 0.0
        %504 = vmatprep.subr.mxu0 0.0
        %505 = vmatpush2.msra.mxu0 0.0
        %506 = vmatprep.subr.mxu0 0.0
        %507 = vmatpush2.msra.mxu0 0.0
        %508 = vmatprep.subr.mxu0 0.0
        %509 = vmatpush2.msra.mxu0 0.0
        %510 = vmatprep.subr.mxu0 0.0
        %511 = vmatpush2.msra.mxu0 0.0
        %512 = vmatprep.subr.mxu0 0.0
        %513 = vmatpush2.msra.mxu0 0.0
        %514 = vmatprep.subr.mxu0 0.0
        %515 = vmatpush2.msra.mxu0 0.0
        %516 = vmatprep.subr.mxu0 0.0
        %517 = vmatpush2.msra.mxu0 0.0
        %518 = vmatprep.subr.mxu0 0.0
        %519 = vmatpush2.msra.mxu0 0.0
        %520 = vmatprep.mubr.f32.mxu0 0.0
        %521 = vmatmul.mubr.f32.gmra.mxu0 %v454
        %v522 = vpop.f32.mrf.mxu0
        %v523 = vadd.f32 %v450, %v522
        %v524 = vpop.f32.mrf.mxu0
        %525 = vdwg.mxu0
        %v526 = vtanh.pop %v523
        %v527 = vld [vmem:[%s5] sm:$0xff]
        %v528 = vld [vmem:[%s5 + $0x8] sm:$0xff]
        %v529 = vld [vmem:[%s5 + $0x10] sm:$0xff]
        %v530 = vld [vmem:[%s5 + $0x18] sm:$0xff]
        %v531 = vld [vmem:[%s6] sm:$0x1]
        %v533 = vlaneseq
        %v534 = vshrl.u32 %v533, 7
        %v535 = vsub.s32 0, %v534
        %v536 = vrot.slane %v531, %v535
        %v539 = vsel %vm452, %v526, 0
        %541 = vmatprep.subr.mxu0 0.0
        %542 = vmatpush1.msra.mxu0 0.0
        %543 = vmatprep.subr.mxu0 0.0
        %544 = vmatpush1.msra.mxu0 0.0
        %545 = vmatprep.subr.mxu0 0.0
        %546 = vmatpush1.msra.mxu0 0.0
        %547 = vmatprep.subr.mxu0 0.0
        %548 = vmatpush1.msra.mxu0 0.0
        %549 = vmatprep.subr.mxu0 0.0
        %550 = vmatpush1.msra.mxu0 0.0
        %551 = vmatprep.subr.mxu0 0.0
        %552 = vmatpush1.msra.mxu0 0.0
        %553 = vmatprep.subr.mxu0 0.0
        %554 = vmatpush1.msra.mxu0 0.0
        %555 = vmatprep.subr.mxu0 0.0
        %556 = vmatpush1.msra.mxu0 0.0
        %557 = vmatprep.subr.mxu0 0.0
        %558 = vmatpush1.msra.mxu0 0.0
        %559 = vmatprep.subr.mxu0 0.0
        %560 = vmatpush1.msra.mxu0 0.0
        %561 = vmatprep.subr.mxu0 0.0
        %562 = vmatpush1.msra.mxu0 0.0
        %563 = vmatprep.subr.mxu0 0.0
        %564 = vmatpush1.msra.mxu0 0.0
        %565 = vmatprep.subr.mxu0 0.0
        %566 = vmatpush1.msra.mxu0 %v530
        %567 = vmatprep.subr.mxu0 0.0
        %568 = vmatpush1.msra.mxu0 %v529
        %569 = vmatprep.subr.mxu0 0.0
        %570 = vmatpush1.msra.mxu0 %v528
        %571 = vmatprep.subr.mxu0 0.0
        %572 = vmatpush1.msra.mxu0 %v527
        %573 = vmatprep.subr.mxu0 0.0
        %574 = vmatpush2.msra.mxu0 0.0
        %575 = vmatprep.subr.mxu0 0.0
        %576 = vmatpush2.msra.mxu0 0.0
        %577 = vmatprep.subr.mxu0 0.0
        %578 = vmatpush2.msra.mxu0 0.0
        %579 = vmatprep.subr.mxu0 0.0
        %580 = vmatpush2.msra.mxu0 0.0
        %581 = vmatprep.subr.mxu0 0.0
        %582 = vmatpush2.msra.mxu0 0.0
        %583 = vmatprep.subr.mxu0 0.0
        %584 = vmatpush2.msra.mxu0 0.0
        %585 = vmatprep.subr.mxu0 0.0
        %586 = vmatpush2.msra.mxu0 0.0
        %587 = vmatprep.subr.mxu0 0.0
        %588 = vmatpush2.msra.mxu0 0.0
        %589 = vmatprep.subr.mxu0 0.0
        %590 = vmatpush2.msra.mxu0 0.0
        %591 = vmatprep.subr.mxu0 0.0
        %592 = vmatpush2.msra.mxu0 0.0
        %593 = vmatprep.subr.mxu0 0.0
        %594 = vmatpush2.msra.mxu0 0.0
        %595 = vmatprep.subr.mxu0 0.0
        %596 = vmatpush2.msra.mxu0 0.0
        %597 = vmatprep.subr.mxu0 0.0
        %598 = vmatpush2.msra.mxu0 0.0
        %599 = vmatprep.subr.mxu0 0.0
        %600 = vmatpush2.msra.mxu0 0.0
        %601 = vmatprep.subr.mxu0 0.0
        %602 = vmatpush2.msra.mxu0 0.0
        %603 = vmatprep.subr.mxu0 0.0
        %604 = vmatpush2.msra.mxu0 0.0
        %605 = vmatprep.mubr.f32.mxu0 0.0
        %606 = vmatmul.mubr.f32.gmra.mxu0 %v539
        %v607 = vpop.f32.mrf.mxu0
        %v608 = vadd.f32 %v536, %v607
        %v609 = vpop.f32.mrf.mxu0
        %610 = vdwg.mxu0
        %vm611 = vcmask 31744
        %v612 = vsel %vm611, %v608, -inf
        %613 = vmax.xlane.f32.xlu0 %v612
        %v614 = vpop.xlane.xlu0 %613
        %v615 = vsub.f32 %v608, %v614
        %v616 = vmul.f32 %v615, 1.442695
        %v617 = vpow.pop %v616
        %v618 = vsel %vm611, %v617, 0.0
        %619 = vadd.xlane.f32.xlu0 %v618
        %v620 = vpop.xlane.xlu0 %619
        %v621 = vrcp.pop %v620
        %v622 = vmul.f32 %v617, %v621
        %623 = vst.msk [vmem:[%s308] sm:$0xff] %vm611, %v622
        %p624 = scmp.lt.s32.totalorder %s22, 1
        %s625 = scalar_select %p624, %s22, 1
        %s626 = smul.addr %s625, 8
        %s627 = scalar_lea.vmem %s7, %s626
        // Predicated region
        $region57: #{tpu_custom_call.1} parent=47 // pred_check
          %p628 = pneg %p192
        $region58: #{tpu_custom_call.1} parent=47 // pred_check_branch
          %630 = sbr.rel (%p628) target = $region60
        $region59: #{tpu_custom_call.1} parent=47 // pred_region
          _
        $region60: #{tpu_custom_call.1} parent=47 // pred_fallthru
          _
      $region48: #{tpu_custom_call.1} parent=5 // pred_fallthru
        _
      %p631 = scmp.le.s32.totalorder 2, %s17
      // Predicated region
      $region61: #{tpu_custom_call.1} parent=5 // pred_check
        %p632 = pneg %p631
      $region62: #{tpu_custom_call.1} parent=5 // pred_check_branch
        %634 = sbr.rel (%p632) target = $region64
      $region63: #{tpu_custom_call.1} parent=5 // pred_region
        %s635 = ssub.s32 %s17, 2
        // Predicated region
        $region65: #{tpu_custom_call.1} parent=63 // pred_check
          %p636 = pneg %p198
        $region66: #{tpu_custom_call.1} parent=63 // pred_check_branch
          %638 = sbr.rel (%p636) target = $region68
        $region67: #{tpu_custom_call.1} parent=63 // pred_region
          %p639 = scmp.lt.s32.totalorder %s23, 1
          %s640 = scalar_select %p639, %s23, 1
          %s641 = smul.addr %s640, 8
          %s642 = scalar_lea.vmem %s7, %s641
        $region68: #{tpu_custom_call.1} parent=63 // pred_fallthru
          _
      $region64: #{tpu_custom_call.1} parent=5 // pred_fallthru
        _
    $region6: #{tpu_custom_call.1} parent=1 // loop_footer
      %s21 = sadd.s32 1, %s17
    $region7: #{tpu_custom_call.1} parent=1 // loop_footer_branch
      %16 = sbr.rel target = $region3
    $region8: #{tpu_custom_call.1} parent=1 // loop_exit
      _
    %643 = vsyncpa [#allocation3], 1
    %s644 = scalar_lea.sflag [#allocation3], 1
    %645 = vsyncpa %s644, 1
    %646 = vsyncpa [#allocation5], 1

</llo_original>
